<compile_context>
chip_gen: v7x
topology: tpu7x:2x2x1
jax: 0.10.0
libtpu: 0.0.40
codegen_flags: <defaults>
</compile_context>

<pallas_src>
import jax
import jax.numpy as jnp
import numpy as np
from jax.experimental import pallas as pl
from jax.experimental.pallas import tpu as pltpu


def _embedding_kernel(x_ref, w_ref, b_ref, o_ref):
    # (TM, K) @ (K, N) + (1, N) -> (TM, N); MXU matmul with f32 accumulation,
    # f32 bias add on the VPU, single cast on store.
    o_ref[...] = (jnp.dot(x_ref[...], w_ref[...],
                          preferred_element_type=jnp.float32)
                  + b_ref[...]).astype(o_ref.dtype)


def _round_up(v, m):
    return (v + m - 1) // m * m


def _pack_factor(l, d_llm):
    # Smallest row-packing factor that makes both the matmul K (= P*l) and the
    # output width (= P*d_llm) full multiples of 128 lanes.
    for p in (1, 2, 4, 8):
        if (p * l) % 128 == 0 and (p * d_llm) % 128 == 0:
            return p
    return 8  # best effort for awkward widths


def time_series_embedding(x, params, *, window, cycle_length, d_model, d_llm,
                          block_rows=16384, compute_dtype=jnp.bfloat16,
                          out_dtype=None):
    """Pallas TPU implementation of TimeSeriesEmbedding.forward.

    compute_dtype / out_dtype control the streamed HBM dtypes (MXU accumulation
    and the bias add stay f32).  bf16 halves HBM traffic; use f32 for bitwise
    tight verification.
    """
    b, n, l = x.shape
    assert l == d_model and d_model % cycle_length == 0
    if out_dtype is None:
        out_dtype = compute_dtype
    d3 = d_llm // 3
    d_long = d_llm - 2 * d3
    c_blocks = d_model // cycle_length
    m = b * n

    f32 = jnp.float32

    # ---- fold all linear ops into a single (L, d_llm) weight (wrapper-side) ----
    k_sm = jax.nn.softmax(params["trend"].reshape(window).astype(f32))      # (W,)

    # Banded causal-conv operator T: x_trend = x @ T,
    # T[s, t] = k[s - t + W - 1] for t-(W-1) <= s <= t, else 0.
    s_idx = jnp.arange(l)[:, None]
    t_idx = jnp.arange(l)[None, :]
    tap_j = s_idx - t_idx + (window - 1)
    T = jnp.where((tap_j >= 0) & (tap_j < window),
                  k_sm[jnp.clip(tap_j, 0, window - 1)], 0.0).astype(f32)    # (L, L)

    s_mat = params["season"].reshape(c_blocks, c_blocks).astype(f32)        # (C, C)
    # 1x1 conv over cycle blocks == right-multiply by kron(S.T, I_cyc): (L, L)
    season_op = jnp.kron(s_mat.T, jnp.eye(cycle_length, dtype=f32))

    w1t = params["linear1_w"].T.astype(f32)                                 # (L, D3)
    b1 = params["linear1_b"].reshape(1, d3).astype(f32)                     # (1, D3)

    eye_l = jnp.eye(l, dtype=f32)
    w_trend = T @ w1t                                                       # (L, D3)
    w_season = (eye_l - T) @ season_op @ w1t                                # (L, D3)
    w_long = jnp.full((l, d_long), 1.0 / l, dtype=f32)                      # (L, d_long)
    w_full = jnp.concatenate([w_trend, w_season, w_long], axis=1)           # (L, d_llm)
    b_full = jnp.concatenate([b1, b1, jnp.zeros((1, d_long), f32)], axis=1)  # (1, d_llm)

    # ---- lane packing: P logical rows per packed row --------------------------
    pack = _pack_factor(l, d_llm)
    k_dim = pack * l                 # matmul K (lane-dense, MXU-native at 256)
    n_dim = pack * d_llm             # output lane width (multiple of 128)

    m_packed_needed = pl.cdiv(m, pack)
    packed_block = max(16, block_rows // pack)

    if m_packed_needed > packed_block:
        tm_p = packed_block                                   # large: stream tiles
    elif m_packed_needed > 16:
        # Medium slab: force >=2 grid steps so the "parallel" axis shards across
        # v7x's two TensorCores; keep sublane dim a multiple of 16 (bf16-safe).
        tm_p = _round_up(pl.cdiv(m_packed_needed, 2), 16)
    else:
        tm_p = m_packed_needed                                # tiny: one full slab

    m_packed = _round_up(m_packed_needed, tm_p)               # grid divides evenly
    m_pad = m_packed * pack
    grid = (m_packed // tm_p,)

    # ---- build packed operands -------------------------------------------------
    x2d = x.reshape(m, l)
    if m_pad != m:
        x2d = jnp.concatenate(
            [x2d, jnp.zeros((m_pad - m, l), x2d.dtype)], axis=0)
    x_pack = x2d.reshape(m_packed, k_dim).astype(compute_dtype)

    if pack > 1:
        w_pack = jnp.kron(jnp.eye(pack, dtype=f32), w_full)   # (K, N) block-diag
        b_pack = jnp.tile(b_full, (1, pack))                  # (1, N)
    else:
        w_pack, b_pack = w_full, b_full
    w_pack = w_pack.astype(compute_dtype)
    b_pack = b_pack.astype(f32)                               # bias stays f32

    # ---- VMEM budget + advisory cost -------------------------------------------
    isz_in = np.dtype(compute_dtype).itemsize
    isz_out = np.dtype(out_dtype).itemsize
    bytes_x_tile = tm_p * k_dim * isz_in
    bytes_o_tile = tm_p * n_dim * isz_out
    bytes_w = k_dim * n_dim * isz_in + n_dim * 4
    vmem_limit = int(min(max(2 * (bytes_x_tile + bytes_o_tile) + bytes_w
                             + (8 << 20), 32 << 20), 64 << 20))

    cost = pl.CostEstimate(
        flops=2 * m_packed * k_dim * n_dim,
        transcendentals=0,
        bytes_accessed=(m_packed * k_dim * isz_in          # x stream
                        + k_dim * n_dim * isz_in           # resident weights
                        + n_dim * 4                        # bias
                        + m_packed * n_dim * isz_out))     # output stream

    out_pack = pl.pallas_call(
        _embedding_kernel,
        out_shape=jax.ShapeDtypeStruct((m_packed, n_dim), out_dtype),
        grid_spec=pltpu.PrefetchScalarGridSpec(
            num_scalar_prefetch=0,
            grid=grid,
            in_specs=[
                pl.BlockSpec((tm_p, k_dim), lambda i: (i, 0)),   # x tile (streamed)
                pl.BlockSpec((k_dim, n_dim), lambda i: (0, 0)),  # W (resident)
                pl.BlockSpec((1, n_dim), lambda i: (0, 0)),      # bias (resident)
            ],
            out_specs=pl.BlockSpec((tm_p, n_dim), lambda i: (i, 0)),
        ),
        compiler_params=pltpu.CompilerParams(
            dimension_semantics=("parallel",),                   # megacore on v7x
            vmem_limit_bytes=vmem_limit),
        cost_estimate=cost,
    )(x_pack, w_pack, b_pack)

    # Contiguous un-pack + strip padding rows.
    out2d = out_pack.reshape(m_pad, d_llm)[:m]
    return out2d.reshape(b, n, d_llm)


def reference(x, params, *, window, cycle_length, d_model, d_llm):
    """Pure-JAX mirror of the PyTorch forward, for verification."""
    b, n, l = x.shape
    d3 = d_llm // 3
    c = d_model // cycle_length
    k = jax.nn.softmax(params["trend"].reshape(window))
    xp = jnp.pad(x, ((0, 0), (0, 0), (window - 1, 0)))
    x_trend = sum(k[j] * xp[..., j:j + l] for j in range(window))
    w, bias = params["linear1_w"], params["linear1_b"]
    t_feat = x_trend @ w.T + bias
    s = params["season"].reshape(c, c)
    xs = (x - x_trend).reshape(b, n, c, cycle_length)
    xs_out = jnp.einsum("oc,bncp->bnop", s, xs).reshape(b, n, l)
    s_feat = xs_out @ w.T + bias
    x_mean = jnp.mean(x, axis=-1, keepdims=True)
    x_long = jnp.repeat(x_mean, d_llm - 2 * d3, axis=-1)
    return jnp.concatenate([t_feat, s_feat, x_long], axis=-1)


if __name__ == "__main__":
    window, cycle_length, d_model, d_llm = 5, 8, 32, 48
    b, n = 2, 8

    key = jax.random.PRNGKey(0)
    k1, k2, k3, k4, k5 = jax.random.split(key, 5)
    c_blocks = d_model // cycle_length
    params = {
        # same shapes as the PyTorch Parameters, deterministic synthetic values
        "trend": 0.1 * jax.random.normal(k1, (1, 1, 1, window), jnp.float32),
        "season": 0.1 * jax.random.normal(k2, (c_blocks, c_blocks, 1, 1), jnp.float32),
        "linear1_w": 0.1 * jax.random.normal(k3, (d_llm // 3, d_model), jnp.float32),
        "linear1_b": 0.1 * jax.random.normal(k4, (d_llm // 3,), jnp.float32),
    }
    x = jax.random.normal(k5, (b, n, d_model), jnp.float32)

    ref = reference(
        x, params, window=window, cycle_length=cycle_length,
        d_model=d_model, d_llm=d_llm)

    # Strict-correctness path: f32 streams, tight tolerance.
    out_f32 = time_series_embedding(
        x, params, window=window, cycle_length=cycle_length,
        d_model=d_model, d_llm=d_llm,
        compute_dtype=jnp.float32, out_dtype=jnp.float32)
    out_f32 = jax.block_until_ready(out_f32)
    np.testing.assert_allclose(np.asarray(out_f32), np.asarray(ref),
                               rtol=2e-4, atol=2e-5)

    # Performance path (default): bf16 x / W / out streams, f32 accumulation.
    out_bf16 = time_series_embedding(
        x, params, window=window, cycle_length=cycle_length,
        d_model=d_model, d_llm=d_llm)
    out_bf16 = jax.block_until_ready(out_bf16)
    np.testing.assert_allclose(
        np.asarray(jnp.asarray(out_bf16, jnp.float32)), np.asarray(ref),
        rtol=5e-2, atol=5e-2)

    assert out_f32.shape == (b, n, d_llm)
    assert out_bf16.shape == (b, n, d_llm)
    print("KERNEL_OK")
</pallas_src>

<mosaic_0001>
module attributes {stable_mosaic.version = 11 : i64} {
  func.func @_embedding_kernel(%arg0: i32, %arg1: memref<2x256xf32, #tpu.memory_space<vmem>>, %arg2: memref<256x384xf32, #tpu.memory_space<vmem>>, %arg3: memref<1x384xf32, #tpu.memory_space<vmem>>, %arg4: memref<2x384xf32, #tpu.memory_space<vmem>>) attributes {dimension_semantics = [#tpu.dimension_semantics<parallel>], iteration_bounds = array<i64: 1>, scalar_prefetch = 0 : i64, scratch_operands = 0 : i64, tpu.core_type = #tpu.core_type<tc>, window_params = [{transform_indices = @transform_0, window_bounds = array<i64: 2, 256>}, {pipeline_mode = #tpu.pipeline_mode<synchronous>, transform_indices = @transform_1, window_bounds = array<i64: 256, 384>}, {pipeline_mode = #tpu.pipeline_mode<synchronous>, transform_indices = @transform_2, window_bounds = array<i64: 1, 384>}, {transform_indices = @transform_3, window_bounds = array<i64: 2, 384>}]} {
    %c0 = arith.constant 0 : index
    %c0_0 = arith.constant 0 : index
    %0 = vector.load %arg1[%c0, %c0_0] : memref<2x256xf32, #tpu.memory_space<vmem>>, vector<2x256xf32>
    %c0_1 = arith.constant 0 : index
    %c0_2 = arith.constant 0 : index
    %1 = vector.load %arg2[%c0_1, %c0_2] : memref<256x384xf32, #tpu.memory_space<vmem>>, vector<256x384xf32>
    %cst = arith.constant dense<0.000000e+00> : vector<2x384xf32>
    %2 = tpu.matmul %0, %1, %cst {dimension_numbers = #tpu.dot_dimension_numbers<[1], [0], [0], [1], [0, 0, 1, 1], [], []>} : vector<2x256xf32>, vector<256x384xf32>, vector<2x384xf32> -> vector<2x384xf32>
    %c0_3 = arith.constant 0 : index
    %c0_4 = arith.constant 0 : index
    %3 = vector.load %arg3[%c0_3, %c0_4] : memref<1x384xf32, #tpu.memory_space<vmem>>, vector<1x384xf32>
    %4 = vector.broadcast %3 : vector<1x384xf32> to vector<2x384xf32>
    %5 = arith.addf %2, %4 : vector<2x384xf32>
    %c0_5 = arith.constant 0 : index
    %c0_6 = arith.constant 0 : index
    %6 = vector.load %arg4[%c0_5, %c0_6] : memref<2x384xf32, #tpu.memory_space<vmem>>, vector<2x384xf32>
    tpu.vector_store %arg4[%c0_5, %c0_6], %5 {strides = array<i32>} : memref<2x384xf32, #tpu.memory_space<vmem>>, vector<2x384xf32>,
    return
  }
  func.func @transform_0(%arg0: i32) -> (i32, i32) {
    %c0_i32 = arith.constant 0 : i32
    %c0_i32_0 = arith.constant 0 : i32
    return %arg0, %c0_i32 : i32, i32
  }
  func.func @transform_1(%arg0: i32) -> (i32, i32) {
    %c0_i32 = arith.constant 0 : i32
    %c0_i32_0 = arith.constant 0 : i32
    %c0_i32_1 = arith.constant 0 : i32
    return %c0_i32, %c0_i32_0 : i32, i32
  }
  func.func @transform_2(%arg0: i32) -> (i32, i32) {
    %c0_i32 = arith.constant 0 : i32
    %c0_i32_0 = arith.constant 0 : i32
    %c0_i32_1 = arith.constant 0 : i32
    return %c0_i32, %c0_i32_0 : i32, i32
  }
  func.func @transform_3(%arg0: i32) -> (i32, i32) {
    %c0_i32 = arith.constant 0 : i32
    %c0_i32_0 = arith.constant 0 : i32
    return %arg0, %c0_i32 : i32, i32
  }
}

</mosaic_0001>

<llo_original>
// kernel: tpu_custom_call.1
$region0: #{tpu_custom_call.1}
  #allocation0 [shape = 'u32[]', space=smem, size = 0x4, offset = 0x4, fixed_abs, tag = 'smem constant byte address 0x4 - core index']
  #allocation1 [shape = 'u32[144,128]{1,0:T(1,128)}', space=vmem, size = 0x12000, scoped, tag = 'internal scratch']
  %s0 = inlined_call_operand.hbm [shape: f32[2,256], index: 0, kind: input, shape index: {}]
  %s1 = inlined_call_operand.hbm [shape: f32[256,384], index: 1, kind: input, shape index: {}]
  %s2 = inlined_call_operand.vmem [shape: f32[1,384], index: 2, kind: input, shape index: {}]
  %s3 = inlined_call_operand.hbm [shape: f32[2,384], index: 3, kind: output, shape index: {}]
  %s4 = sld [smem:[#allocation0]]
  $region30: #{tpu_custom_call.1} parent=0
    _
  %s6 = ssub.s32 1, %s4
  %s7 = scalar_select 0, %s6, %s4
  $region1: #{tpu_custom_call.1} parent=0
    #allocation2 [shape = 'u8[2048]{0}', space=vmem, size = 0x800, scoped, tag = 'input window, operand 0, single buffered']
    #allocation3 [shape = 's32[1]{0}', space=sflag, size = 0x4, scoped, tag = 'scoped memory for tpu_custom_call.1']
    #allocation4 [shape = 's32[1]{0}', space=sflag, size = 0x4, scoped, tag = 'scoped memory for tpu_custom_call.1']
    #allocation5 [shape = 'u8[393216]{0}', space=vmem, size = 0x60000, scoped, tag = 'input window, operand 1, single buffered']
    #allocation6 [shape = 's32[1]{0}', space=sflag, size = 0x4, scoped, tag = 'scoped memory for tpu_custom_call.1']
    #allocation7 [shape = 'u8[3072]{0}', space=vmem, size = 0xc00, scoped, tag = 'output window, operand 0, single buffered']
    %8 = vsyncpa [#allocation3], 0
    %9 = vsyncpa [#allocation6], 0
    %10 = vsyncpa [#allocation4], 0
    // Predicated region
    $region2: #{tpu_custom_call.1} parent=1 // pred_check
      _
    $region3: #{tpu_custom_call.1} parent=1 // pred_check_branch
      %12 = sbr.rel (0) target = $region5
    $region4: #{tpu_custom_call.1} parent=1 // pred_region
      %s14 = ssub.s32 64, 64
      %15 = vsyncadd [#allocation3], %s14
      %s17 = sshll.u32 [#allocation2], 4
      %s18 = int_to_ptr.vmem [resolvable:$true] %s17
      %20 = dma.hbm_to_vmem [thread:$0]  %s0, 64, %s18, [#allocation3]
    $region5: #{tpu_custom_call.1} parent=1 // pred_fallthru
      _
    // Predicated region
    $region6: #{tpu_custom_call.1} parent=1 // pred_check
      _
    $region7: #{tpu_custom_call.1} parent=1 // pred_check_branch
      %22 = sbr.rel (0) target = $region9
    $region8: #{tpu_custom_call.1} parent=1 // pred_region
      %s24 = ssub.s32 12288, 12288
      %25 = vsyncadd [#allocation6], %s24
      %s26 = sshll.u32 [#allocation5], 4
      %s27 = int_to_ptr.vmem [resolvable:$true] %s26
      %32 = dma.hbm_to_vmem [thread:$0]  %s1, 12288, %s27, [#allocation6], 384, 384, 24
    $region9: #{tpu_custom_call.1} parent=1 // pred_fallthru
      _
    // Predicated region
    $region10: #{tpu_custom_call.1} parent=1 // pred_check
      _
    $region11: #{tpu_custom_call.1} parent=1 // pred_check_branch
      %34 = sbr.rel (0) target = $region13
    $region12: #{tpu_custom_call.1} parent=1 // pred_region
      _
    $region13: #{tpu_custom_call.1} parent=1 // pred_fallthru
      _
    // Predicated region
    $region14: #{tpu_custom_call.1} parent=1 // pred_check
      _
    $region15: #{tpu_custom_call.1} parent=1 // pred_check_branch
      %36 = sbr.rel (0) target = $region17
    $region16: #{tpu_custom_call.1} parent=1 // pred_region
      %37 = dma.done [#allocation3], 64
    $region17: #{tpu_custom_call.1} parent=1 // pred_fallthru
      _
    // Predicated region
    $region18: #{tpu_custom_call.1} parent=1 // pred_check
      _
    $region19: #{tpu_custom_call.1} parent=1 // pred_check_branch
      %39 = sbr.rel (0) target = $region21
    $region20: #{tpu_custom_call.1} parent=1 // pred_region
      %40 = dma.done [#allocation6], 12288
    $region21: #{tpu_custom_call.1} parent=1 // pred_fallthru
      _
    %v41 = vld [vmem:[#allocation2] sm:$0xf]
    %v42 = vld [vmem:[#allocation5] sm:$0xff]
    %v43 = vld [vmem:[#allocation5 + $0x8] sm:$0xff]
    %v44 = vld [vmem:[#allocation5 + $0x10] sm:$0xff]
    %v45 = vld [vmem:[#allocation5 + $0x18] sm:$0xff]
    %v46 = vld [vmem:[#allocation5 + $0x20] sm:$0xff]
    %v47 = vld [vmem:[#allocation5 + $0x28] sm:$0xff]
    %v48 = vld [vmem:[#allocation5 + $0x30] sm:$0xff]
    %v49 = vld [vmem:[#allocation5 + $0x38] sm:$0xff]
    %v50 = vld [vmem:[#allocation5 + $0x40] sm:$0xff]
    %v51 = vld [vmem:[#allocation5 + $0x48] sm:$0xff]
    %v52 = vld [vmem:[#allocation5 + $0x50] sm:$0xff]
    %v53 = vld [vmem:[#allocation5 + $0x58] sm:$0xff]
    %v54 = vld [vmem:[#allocation5 + $0x60] sm:$0xff]
    %v55 = vld [vmem:[#allocation5 + $0x68] sm:$0xff]
    %v56 = vld [vmem:[#allocation5 + $0x70] sm:$0xff]
    %v57 = vld [vmem:[#allocation5 + $0x78] sm:$0xff]
    %v58 = vld [vmem:[#allocation5 + $0x80] sm:$0xff]
    %v59 = vld [vmem:[#allocation5 + $0x88] sm:$0xff]
    %v60 = vld [vmem:[#allocation5 + $0x90] sm:$0xff]
    %v61 = vld [vmem:[#allocation5 + $0x98] sm:$0xff]
    %v62 = vld [vmem:[#allocation5 + $0xa0] sm:$0xff]
    %v63 = vld [vmem:[#allocation5 + $0xa8] sm:$0xff]
    %v64 = vld [vmem:[#allocation5 + $0xb0] sm:$0xff]
    %v65 = vld [vmem:[#allocation5 + $0xb8] sm:$0xff]
    %v66 = vld [vmem:[#allocation5 + $0xc0] sm:$0xff]
    %v67 = vld [vmem:[#allocation5 + $0xc8] sm:$0xff]
    %v68 = vld [vmem:[#allocation5 + $0xd0] sm:$0xff]
    %v69 = vld [vmem:[#allocation5 + $0xd8] sm:$0xff]
    %v70 = vld [vmem:[#allocation5 + $0xe0] sm:$0xff]
    %v71 = vld [vmem:[#allocation5 + $0xe8] sm:$0xff]
    %v72 = vld [vmem:[#allocation5 + $0xf0] sm:$0xff]
    %v73 = vld [vmem:[#allocation5 + $0xf8] sm:$0xff]
    %v74 = vld [vmem:[#allocation5 + $0x100] sm:$0xff]
    %v75 = vld [vmem:[#allocation5 + $0x108] sm:$0xff]
    %v76 = vld [vmem:[#allocation5 + $0x110] sm:$0xff]
    %v77 = vld [vmem:[#allocation5 + $0x118] sm:$0xff]
    %v78 = vld [vmem:[#allocation5 + $0x120] sm:$0xff]
    %v79 = vld [vmem:[#allocation5 + $0x128] sm:$0xff]
    %v80 = vld [vmem:[#allocation5 + $0x130] sm:$0xff]
    %v81 = vld [vmem:[#allocation5 + $0x138] sm:$0xff]
    %v82 = vld [vmem:[#allocation5 + $0x140] sm:$0xff]
    %v83 = vld [vmem:[#allocation5 + $0x148] sm:$0xff]
    %v84 = vld [vmem:[#allocation5 + $0x150] sm:$0xff]
    %v85 = vld [vmem:[#allocation5 + $0x158] sm:$0xff]
    %v86 = vld [vmem:[#allocation5 + $0x160] sm:$0xff]
    %v87 = vld [vmem:[#allocation5 + $0x168] sm:$0xff]
    %v88 = vld [vmem:[#allocation5 + $0x170] sm:$0xff]
    %v89 = vld [vmem:[#allocation5 + $0x178] sm:$0xff]
    %v90 = vld [vmem:[#allocation5 + $0x180] sm:$0xff]
    %v91 = vld [vmem:[#allocation5 + $0x188] sm:$0xff]
    %v92 = vld [vmem:[#allocation5 + $0x190] sm:$0xff]
    %v93 = vld [vmem:[#allocation5 + $0x198] sm:$0xff]
    %v94 = vld [vmem:[#allocation5 + $0x1a0] sm:$0xff]
    %v95 = vld [vmem:[#allocation5 + $0x1a8] sm:$0xff]
    %v96 = vld [vmem:[#allocation5 + $0x1b0] sm:$0xff]
    %v97 = vld [vmem:[#allocation5 + $0x1b8] sm:$0xff]
    %v98 = vld [vmem:[#allocation5 + $0x1c0] sm:$0xff]
    %v99 = vld [vmem:[#allocation5 + $0x1c8] sm:$0xff]
    %v100 = vld [vmem:[#allocation5 + $0x1d0] sm:$0xff]
    %v101 = vld [vmem:[#allocation5 + $0x1d8] sm:$0xff]
    %v102 = vld [vmem:[#allocation5 + $0x1e0] sm:$0xff]
    %v103 = vld [vmem:[#allocation5 + $0x1e8] sm:$0xff]
    %v104 = vld [vmem:[#allocation5 + $0x1f0] sm:$0xff]
    %v105 = vld [vmem:[#allocation5 + $0x1f8] sm:$0xff]
    %v106 = vld [vmem:[#allocation5 + $0x200] sm:$0xff]
    %v107 = vld [vmem:[#allocation5 + $0x208] sm:$0xff]
    %v108 = vld [vmem:[#allocation5 + $0x210] sm:$0xff]
    %v109 = vld [vmem:[#allocation5 + $0x218] sm:$0xff]
    %v110 = vld [vmem:[#allocation5 + $0x220] sm:$0xff]
    %v111 = vld [vmem:[#allocation5 + $0x228] sm:$0xff]
    %v112 = vld [vmem:[#allocation5 + $0x230] sm:$0xff]
    %v113 = vld [vmem:[#allocation5 + $0x238] sm:$0xff]
    %v114 = vld [vmem:[#allocation5 + $0x240] sm:$0xff]
    %v115 = vld [vmem:[#allocation5 + $0x248] sm:$0xff]
    %v116 = vld [vmem:[#allocation5 + $0x250] sm:$0xff]
    %v117 = vld [vmem:[#allocation5 + $0x258] sm:$0xff]
    %v118 = vld [vmem:[#allocation5 + $0x260] sm:$0xff]
    %v119 = vld [vmem:[#allocation5 + $0x268] sm:$0xff]
    %v120 = vld [vmem:[#allocation5 + $0x270] sm:$0xff]
    %v121 = vld [vmem:[#allocation5 + $0x278] sm:$0xff]
    %v122 = vld [vmem:[#allocation5 + $0x280] sm:$0xff]
    %v123 = vld [vmem:[#allocation5 + $0x288] sm:$0xff]
    %v124 = vld [vmem:[#allocation5 + $0x290] sm:$0xff]
    %v125 = vld [vmem:[#allocation5 + $0x298] sm:$0xff]
    %v126 = vld [vmem:[#allocation5 + $0x2a0] sm:$0xff]
    %v127 = vld [vmem:[#allocation5 + $0x2a8] sm:$0xff]
    %v128 = vld [vmem:[#allocation5 + $0x2b0] sm:$0xff]
    %v129 = vld [vmem:[#allocation5 + $0x2b8] sm:$0xff]
    %v130 = vld [vmem:[#allocation5 + $0x2c0] sm:$0xff]
    %v131 = vld [vmem:[#allocation5 + $0x2c8] sm:$0xff]
    %v132 = vld [vmem:[#allocation5 + $0x2d0] sm:$0xff]
    %v133 = vld [vmem:[#allocation5 + $0x2d8] sm:$0xff]
    %v134 = vld [vmem:[#allocation5 + $0x2e0] sm:$0xff]
    %v135 = vld [vmem:[#allocation5 + $0x2e8] sm:$0xff]
    %v136 = vld [vmem:[#allocation5 + $0x2f0] sm:$0xff]
    %v137 = vld [vmem:[#allocation5 + $0x2f8] sm:$0xff]
    %v138 = vld [vmem:[%s2] sm:$0x7]
    %v140 = vlaneseq
    %v141 = vshrl.u32 %v140, 7
    %v142 = vsub.s32 0, %v141
    %v143 = vrot.slane %v138, %v142
    %v144 = vlaneseq
    %v145 = vshrl.u32 %v144, 7
    %v146 = vsub.s32 1, %v145
    %v147 = vrot.slane %v138, %v146
    %v148 = vlaneseq
    %v149 = vshrl.u32 %v148, 7
    %v150 = vsub.s32 2, %v149
    %v151 = vrot.slane %v138, %v150
    %v157 = vunpack.c.l.s4 1983009808
    %v158 = vunpack.c.0.s8 %v157
    %v159 = vlaneseq
    %v160 = vshrl.u32 %v159, 7
    %v161 = vsub.s32 %v158, %v160
    %v162 = vrot.slane %v41, %v161
    %v163 = vcombine.high %v162, %v162
    %166 = vmatprep.subr.mxu0 %v43
    %167 = vmatpush1.msra.mxu0 %v42
    %168 = vmatprep.subr.mxu0 %v46
    %169 = vmatpush1.msra.mxu0 %v45
    %170 = vmatprep.subr.mxu0 %v49
    %171 = vmatpush1.msra.mxu0 %v48
    %172 = vmatprep.subr.mxu0 %v52
    %173 = vmatpush1.msra.mxu0 %v51
    %174 = vmatprep.subr.mxu0 %v55
    %175 = vmatpush1.msra.mxu0 %v54
    %176 = vmatprep.subr.mxu0 %v58
    %177 = vmatpush1.msra.mxu0 %v57
    %178 = vmatprep.subr.mxu0 %v61
    %179 = vmatpush1.msra.mxu0 %v60
    %180 = vmatprep.subr.mxu0 %v64
    %181 = vmatpush1.msra.mxu0 %v63
    %182 = vmatprep.subr.mxu0 %v67
    %183 = vmatpush1.msra.mxu0 %v66
    %184 = vmatprep.subr.mxu0 %v70
    %185 = vmatpush1.msra.mxu0 %v69
    %186 = vmatprep.subr.mxu0 %v73
    %187 = vmatpush1.msra.mxu0 %v72
    %188 = vmatprep.subr.mxu0 %v76
    %189 = vmatpush1.msra.mxu0 %v75
    %190 = vmatprep.subr.mxu0 %v79
    %191 = vmatpush1.msra.mxu0 %v78
    %192 = vmatprep.subr.mxu0 %v82
    %193 = vmatpush1.msra.mxu0 %v81
    %194 = vmatprep.subr.mxu0 %v85
    %195 = vmatpush1.msra.mxu0 %v84
    %196 = vmatprep.subr.mxu0 %v88
    %197 = vmatpush1.msra.mxu0 %v87
    %198 = vmatprep.subr.mxu0 %v91
    %199 = vmatpush1.msra.mxu0 %v90
    %200 = vmatprep.subr.mxu0 %v94
    %201 = vmatpush1.msra.mxu0 %v93
    %202 = vmatprep.subr.mxu0 %v97
    %203 = vmatpush1.msra.mxu0 %v96
    %204 = vmatprep.subr.mxu0 %v100
    %205 = vmatpush1.msra.mxu0 %v99
    %206 = vmatprep.subr.mxu0 %v103
    %207 = vmatpush1.msra.mxu0 %v102
    %208 = vmatprep.subr.mxu0 %v106
    %209 = vmatpush1.msra.mxu0 %v105
    %210 = vmatprep.subr.mxu0 %v109
    %211 = vmatpush1.msra.mxu0 %v108
    %212 = vmatprep.subr.mxu0 %v112
    %213 = vmatpush1.msra.mxu0 %v111
    %214 = vmatprep.subr.mxu0 %v115
    %215 = vmatpush1.msra.mxu0 %v114
    %216 = vmatprep.subr.mxu0 %v118
    %217 = vmatpush1.msra.mxu0 %v117
    %218 = vmatprep.subr.mxu0 %v121
    %219 = vmatpush1.msra.mxu0 %v120
    %220 = vmatprep.subr.mxu0 %v124
    %221 = vmatpush1.msra.mxu0 %v123
    %222 = vmatprep.subr.mxu0 %v127
    %223 = vmatpush1.msra.mxu0 %v126
    %224 = vmatprep.subr.mxu0 %v130
    %225 = vmatpush1.msra.mxu0 %v129
    %226 = vmatprep.subr.mxu0 %v133
    %227 = vmatpush1.msra.mxu0 %v132
    %228 = vmatprep.subr.mxu0 %v136
    %229 = vmatpush1.msra.mxu0 %v135
    %230 = vmatprep.mubr.f32.mxu0 %v163
    %231 = vmatmul.mubr.f32.gmra.mrb[0].mxu0 %v162
    %v232 = vpop.f32.mrb[0].mxu0
    %v233 = vadd.f32 %v143, %v232
    %v234 = vpop.f32.mrb[0].mxu0
    %v235 = vadd.f32 %v147, %v234
    %236 = vdwg.mxu0
    %237 = vmatprep.subr.mxu0 0.0
    %238 = vmatpush1.msra.mxu0 %v44
    %239 = vmatprep.subr.mxu0 0.0
    %240 = vmatpush1.msra.mxu0 %v47
    %241 = vmatprep.subr.mxu0 0.0
    %242 = vmatpush1.msra.mxu0 %v50
    %243 = vmatprep.subr.mxu0 0.0
    %244 = vmatpush1.msra.mxu0 %v53
    %245 = vmatprep.subr.mxu0 0.0
    %246 = vmatpush1.msra.mxu0 %v56
    %247 = vmatprep.subr.mxu0 0.0
    %248 = vmatpush1.msra.mxu0 %v59
    %249 = vmatprep.subr.mxu0 0.0
    %250 = vmatpush1.msra.mxu0 %v62
    %251 = vmatprep.subr.mxu0 0.0
    %252 = vmatpush1.msra.mxu0 %v65
    %253 = vmatprep.subr.mxu0 0.0
    %254 = vmatpush1.msra.mxu0 %v68
    %255 = vmatprep.subr.mxu0 0.0
    %256 = vmatpush1.msra.mxu0 %v71
    %257 = vmatprep.subr.mxu0 0.0
    %258 = vmatpush1.msra.mxu0 %v74
    %259 = vmatprep.subr.mxu0 0.0
    %260 = vmatpush1.msra.mxu0 %v77
    %261 = vmatprep.subr.mxu0 0.0
    %262 = vmatpush1.msra.mxu0 %v80
    %263 = vmatprep.subr.mxu0 0.0
    %264 = vmatpush1.msra.mxu0 %v83
    %265 = vmatprep.subr.mxu0 0.0
    %266 = vmatpush1.msra.mxu0 %v86
    %267 = vmatprep.subr.mxu0 0.0
    %268 = vmatpush1.msra.mxu0 %v89
    %269 = vmatprep.subr.mxu0 0.0
    %270 = vmatpush1.msra.mxu0 %v92
    %271 = vmatprep.subr.mxu0 0.0
    %272 = vmatpush1.msra.mxu0 %v95
    %273 = vmatprep.subr.mxu0 0.0
    %274 = vmatpush1.msra.mxu0 %v98
    %275 = vmatprep.subr.mxu0 0.0
    %276 = vmatpush1.msra.mxu0 %v101
    %277 = vmatprep.subr.mxu0 0.0
    %278 = vmatpush1.msra.mxu0 %v104
    %279 = vmatprep.subr.mxu0 0.0
    %280 = vmatpush1.msra.mxu0 %v107
    %281 = vmatprep.subr.mxu0 0.0
    %282 = vmatpush1.msra.mxu0 %v110
    %283 = vmatprep.subr.mxu0 0.0
    %284 = vmatpush1.msra.mxu0 %v113
    %285 = vmatprep.subr.mxu0 0.0
    %286 = vmatpush1.msra.mxu0 %v116
    %287 = vmatprep.subr.mxu0 0.0
    %288 = vmatpush1.msra.mxu0 %v119
    %289 = vmatprep.subr.mxu0 0.0
    %290 = vmatpush1.msra.mxu0 %v122
    %291 = vmatprep.subr.mxu0 0.0
    %292 = vmatpush1.msra.mxu0 %v125
    %293 = vmatprep.subr.mxu0 0.0
    %294 = vmatpush1.msra.mxu0 %v128
    %295 = vmatprep.subr.mxu0 0.0
    %296 = vmatpush1.msra.mxu0 %v131
    %297 = vmatprep.subr.mxu0 0.0
    %298 = vmatpush1.msra.mxu0 %v134
    %299 = vmatprep.subr.mxu0 0.0
    %300 = vmatpush1.msra.mxu0 %v137
    %301 = vmatprep.mubr.f32.mxu0 %v163
    %302 = vmatmul.mubr.f32.gmra.mrb[0].mxu0 %v162
    %v303 = vpop.f32.mrb[0].mxu0
    %v304 = vadd.f32 %v151, %v303
    %v305 = vpop.f32.mrb[0].mxu0
    %306 = vdwg.mxu0
    %v310 = vcombine.low %v233, %v235
    %v312 = vunpack.c.l.s4 1983009808
    %v313 = vunpack.c.0.s8 %v312
    %v314 = vlaneseq
    %v315 = vshrl.u32 %v314, 7
    %v316 = vsub.s32 %v313, %v315
    %v317 = vrot.slane %v310, %v316
    %v319 = vunpack.c.l.s4 1983009808
    %v320 = vunpack.c.0.s8 %v319
    %v321 = vlaneseq
    %v322 = vshrl.u32 %v321, 7
    %v323 = vsub.s32 %v320, %v322
    %v324 = vrot.slane %v304, %v323
    %v325 = vcombine.low %v317, %v324
    %327 = vst [vmem:[#allocation7] sm:$0x3f] %v325
    // Predicated region
    $region22: #{tpu_custom_call.1} parent=1 // pred_check
      _
    $region23: #{tpu_custom_call.1} parent=1 // pred_check_branch
      %329 = sbr.rel (0) target = $region25
    $region24: #{tpu_custom_call.1} parent=1 // pred_region
      %s331 = ssub.s32 96, 96
      %332 = vsyncadd [#allocation4], %s331
      %s334 = sshll.u32 [#allocation7], 4
      %s335 = int_to_ptr.vmem [resolvable:$true] %s334
      %337 = dma.vmem_to_hbm [thread:$0]  %s335, 96, %s3, [#allocation4]
    $region25: #{tpu_custom_call.1} parent=1 // pred_fallthru
      _
    // Predicated region
    $region26: #{tpu_custom_call.1} parent=1 // pred_check
      _
    $region27: #{tpu_custom_call.1} parent=1 // pred_check_branch
      %339 = sbr.rel (0) target = $region29
    $region28: #{tpu_custom_call.1} parent=1 // pred_region
      %340 = dma.done [#allocation4], 96
    $region29: #{tpu_custom_call.1} parent=1 // pred_fallthru
      _
    %341 = vsyncpa [#allocation3], 1
    %342 = vsyncpa [#allocation6], 1
    %343 = vsyncpa [#allocation4], 1

</llo_original>
